<compile_context>
chip_gen: v5e
topology: v5e:2x2
jax: 0.10.0
libtpu: 0.0.40
codegen_flags: <defaults>
</compile_context>

<pallas_src>
import jax
import jax.numpy as jnp
from jax.experimental import pallas as pl
from jax.experimental.pallas import tpu as pltpu

GAMMA = 2.0   # fixed at 2 -> explicit square in the kernel
ALPHA = 0.25

# ~512K elements per block: well into the flat part of the measured HBM-roofline
# curve for tiled elementwise kernels, small enough to double-buffer comfortably.
_TARGET_BLOCK_ELEMS = 512 * 1024


def _focal_loss_kernel(x_ref, t_ref, o_ref):
    x = x_ref[...]
    t = t_ref[...]
    if x.dtype != jnp.float32:
        x = x.astype(jnp.float32)
    if t.dtype != jnp.float32:
        t = t.astype(jnp.float32)
    # Numerically-stable BCE-with-logits (matches torch F.binary_cross_entropy_with_logits):
    #   max(x, 0) - x*t + log1p(exp(-|x|))
    bce = jnp.maximum(x, 0.0) - x * t + jnp.log1p(jnp.exp(-jnp.abs(x)))
    pt = jnp.exp(bce)                      # exp(+bce), exactly as in the original module
    d = 1.0 - pt
    loss = (ALPHA * (d * d)) * bce         # gamma=2: explicit square, no float pow
    o_ref[...] = loss.astype(o_ref.dtype)


def _pick_2d_view(shape):
    """Choose a lane-dense (M, N) view of the flattened tensor.

    Prefers N a large multiple of 128 (unmasked vst/vld); falls back to the
    original trailing dim when the total size is not 128-aligned.
    """
    total = 1
    for s in shape:
        total *= int(s)
    if total == 0:
        return 1, max(total, 1)
    # Try wide lane-aligned widths first.
    for w in (4096, 2048, 1024, 512, 256, 128):
        if total % w == 0:
            return total // w, w
    # Fall back: keep the original last dim on the lane axis.
    last = int(shape[-1]) if len(shape) >= 1 else 1
    last = max(last, 1)
    return total // last, last


def focal_loss(logits, target):
    """Elementwise focal loss. Accepts any rank; relayouts to a lane-dense 2-D view."""
    assert logits.shape == target.shape
    orig_shape = logits.shape
    out_dtype = logits.dtype

    M, N = _pick_2d_view(orig_shape)
    x2 = logits.reshape(M, N)
    t2 = target.reshape(M, N)

    # Lane tile: full width (N is either a chosen multiple of 128 or the ragged
    # original last dim — both legal as a full-extent block).
    tn_eff = N
    # Sublane tile: multiple of 8 sized so one block holds ~_TARGET_BLOCK_ELEMS,
    # or the full height when the array is small.
    tm_target = max(8, (_TARGET_BLOCK_ELEMS // max(tn_eff, 1) // 8) * 8)
    tm_eff = M if M <= tm_target else tm_target

    grid = (pl.cdiv(M, tm_eff), 1)

    # 2 inputs + 1 output per block, double-buffered by the pipeline; add headroom,
    # stay below v7x's 64 MiB physical VMEM.
    block_bytes = tm_eff * tn_eff * (
        jnp.dtype(logits.dtype).itemsize
        + jnp.dtype(target.dtype).itemsize
        + jnp.dtype(out_dtype).itemsize
    )
    vmem_limit = int(min(56 * 1024 * 1024,
                         max(16 * 1024 * 1024, int(2.5 * block_bytes))))

    out2 = pl.pallas_call(
        _focal_loss_kernel,
        out_shape=jax.ShapeDtypeStruct((M, N), out_dtype),
        grid_spec=pltpu.PrefetchScalarGridSpec(
            num_scalar_prefetch=0,
            grid=grid,
            in_specs=[
                pl.BlockSpec((tm_eff, tn_eff), lambda i, j: (i, j)),
                pl.BlockSpec((tm_eff, tn_eff), lambda i, j: (i, j)),
            ],
            out_specs=pl.BlockSpec((tm_eff, tn_eff), lambda i, j: (i, j)),
        ),
        compiler_params=pltpu.CompilerParams(
            dimension_semantics=("parallel", "parallel"),
            vmem_limit_bytes=vmem_limit,
        ),
    )(x2, t2)
    return out2.reshape(orig_shape)


def _focal_loss_ref(logits, target):
    x = logits.astype(jnp.float32)
    t = target.astype(jnp.float32)
    bce = jnp.maximum(x, 0.0) - x * t + jnp.log1p(jnp.exp(-jnp.abs(x)))
    pt = jnp.exp(bce)
    d = 1.0 - pt
    return (ALPHA * d * d * bce).astype(logits.dtype)


if __name__ == "__main__":
    key = jax.random.PRNGKey(0)
    k1, k2, k3, k4 = jax.random.split(key, 4)

    # Case 1: small, tile-friendly f32 shape (consistent with DDI fingerprint-style features).
    batch, feat = 16, 256
    logits = jax.random.normal(k1, (batch, feat), dtype=jnp.float32)
    target = jax.random.bernoulli(k2, p=0.5, shape=(batch, feat)).astype(jnp.float32)

    out = jax.block_until_ready(focal_loss(logits, target))
    ref = _focal_loss_ref(logits, target)
    assert out.shape == logits.shape and out.dtype == logits.dtype
    assert jnp.allclose(out, ref, atol=1e-5, rtol=1e-5), "mismatch vs reference (f32)"

    # Case 2: non-128-aligned shape + bf16 inputs (dtype-preserving output, ragged lane tile path).
    logits_b = jax.random.normal(k3, (10, 200), dtype=jnp.bfloat16)
    target_b = jax.random.bernoulli(k4, p=0.5, shape=(10, 200)).astype(jnp.bfloat16)

    out_b = jax.block_until_ready(focal_loss(logits_b, target_b))
    ref_b = _focal_loss_ref(logits_b, target_b)
    assert out_b.shape == logits_b.shape and out_b.dtype == jnp.bfloat16
    assert jnp.allclose(out_b.astype(jnp.float32), ref_b.astype(jnp.float32),
                        atol=2e-2, rtol=2e-2), "mismatch vs reference (bf16)"

    print("KERNEL_OK")
</pallas_src>

<mosaic_0001>
module attributes {stable_mosaic.version = 11 : i64} {
  func.func @_focal_loss_kernel(%arg0: i32, %arg1: i32, %arg2: memref<1x4096xf32, #tpu.memory_space<vmem>>, %arg3: memref<1x4096xf32, #tpu.memory_space<vmem>>, %arg4: memref<1x4096xf32, #tpu.memory_space<vmem>>) attributes {dimension_semantics = [#tpu.dimension_semantics<parallel>, #tpu.dimension_semantics<parallel>], iteration_bounds = array<i64: 1, 1>, scalar_prefetch = 0 : i64, scratch_operands = 0 : i64, tpu.core_type = #tpu.core_type<tc>, window_params = [{transform_indices = @transform_0, window_bounds = array<i64: 1, 4096>}, {transform_indices = @transform_1, window_bounds = array<i64: 1, 4096>}, {transform_indices = @transform_2, window_bounds = array<i64: 1, 4096>}]} {
    %c0 = arith.constant 0 : index
    %c0_0 = arith.constant 0 : index
    %0 = vector.load %arg2[%c0, %c0_0] : memref<1x4096xf32, #tpu.memory_space<vmem>>, vector<1x4096xf32>
    %c0_1 = arith.constant 0 : index
    %c0_2 = arith.constant 0 : index
    %1 = vector.load %arg3[%c0_1, %c0_2] : memref<1x4096xf32, #tpu.memory_space<vmem>>, vector<1x4096xf32>
    %cst = arith.constant 0.000000e+00 : f32
    %2 = vector.broadcast %cst : f32 to vector<1x4096xf32>
    %3 = arith.maximumf %0, %2 : vector<1x4096xf32>
    %4 = arith.mulf %0, %1 : vector<1x4096xf32>
    %5 = arith.subf %3, %4 : vector<1x4096xf32>
    %6 = math.absf %0 : vector<1x4096xf32>
    %cst_3 = arith.constant 0.000000e+00 : f32
    %7 = vector.broadcast %cst_3 : f32 to vector<1x4096xf32>
    %8 = arith.subf %7, %6 : vector<1x4096xf32>
    %9 = math.exp %8 : vector<1x4096xf32>
    %10 = math.log1p %9 : vector<1x4096xf32>
    %11 = arith.addf %5, %10 : vector<1x4096xf32>
    %12 = math.exp %11 : vector<1x4096xf32>
    %cst_4 = arith.constant 1.000000e+00 : f32
    %13 = vector.broadcast %cst_4 : f32 to vector<1x4096xf32>
    %14 = arith.subf %13, %12 : vector<1x4096xf32>
    %15 = arith.mulf %14, %14 : vector<1x4096xf32>
    %cst_5 = arith.constant 2.500000e-01 : f32
    %16 = vector.broadcast %cst_5 : f32 to vector<1x4096xf32>
    %17 = arith.mulf %16, %15 : vector<1x4096xf32>
    %18 = arith.mulf %17, %11 : vector<1x4096xf32>
    %c0_6 = arith.constant 0 : index
    %c0_7 = arith.constant 0 : index
    %19 = vector.load %arg4[%c0_6, %c0_7] : memref<1x4096xf32, #tpu.memory_space<vmem>>, vector<1x4096xf32>
    tpu.vector_store %arg4[%c0_6, %c0_7], %18 {strides = array<i32>} : memref<1x4096xf32, #tpu.memory_space<vmem>>, vector<1x4096xf32>,
    return
  }
  func.func @transform_0(%arg0: i32, %arg1: i32) -> (i32, i32) {
    %c0_i32 = arith.constant 0 : i32
    return %arg0, %arg1 : i32, i32
  }
  func.func @transform_1(%arg0: i32, %arg1: i32) -> (i32, i32) {
    %c0_i32 = arith.constant 0 : i32
    return %arg0, %arg1 : i32, i32
  }
  func.func @transform_2(%arg0: i32, %arg1: i32) -> (i32, i32) {
    %c0_i32 = arith.constant 0 : i32
    return %arg0, %arg1 : i32, i32
  }
}

</mosaic_0001>

<llo_original>
// kernel: tpu_custom_call.1
$region0: #{tpu_custom_call.1}
  #allocation0 [shape = 'u32[]', space=smem, size = 0x4, offset = 0x4, fixed_abs, tag = 'smem constant byte address 0x4 - core index']
  #allocation1 [shape = 'u32[72,128]{1,0:T(1,128)}', space=vmem, size = 0x9000, scoped, tag = 'internal scratch']
  %s0 = inlined_call_operand.hbm [shape: f32[1,4096], index: 0, kind: input, shape index: {}]
  %s1 = inlined_call_operand.hbm [shape: f32[1,4096], index: 1, kind: input, shape index: {}]
  %s2 = inlined_call_operand.hbm [shape: f32[1,4096], index: 2, kind: output, shape index: {}]
  %s3 = sld [smem:[#allocation0]]
  $region26: #{tpu_custom_call.1} parent=0
    _
  %s5 = ssub.s32 1, %s3
  %s6 = scalar_select 0, %s5, %s3
  $region1: #{tpu_custom_call.1} parent=0
    #allocation2 [shape = 'u8[16384]{0}', space=vmem, size = 0x4000, scoped, tag = 'input window, operand 0, single buffered']
    #allocation3 [shape = 's32[1]{0}', space=sflag, size = 0x4, scoped, tag = 'scoped memory for tpu_custom_call.1']
    #allocation4 [shape = 's32[1]{0}', space=sflag, size = 0x4, scoped, tag = 'scoped memory for tpu_custom_call.1']
    #allocation5 [shape = 'u8[16384]{0}', space=vmem, size = 0x4000, scoped, tag = 'input window, operand 1, single buffered']
    #allocation6 [shape = 's32[1]{0}', space=sflag, size = 0x4, scoped, tag = 'scoped memory for tpu_custom_call.1']
    #allocation7 [shape = 'u8[16384]{0}', space=vmem, size = 0x4000, scoped, tag = 'output window, operand 0, single buffered']
    %7 = vsyncpa [#allocation3], 0
    %8 = vsyncpa [#allocation6], 0
    %9 = vsyncpa [#allocation4], 0
    // Predicated region
    $region2: #{tpu_custom_call.1} parent=1 // pred_check
      _
    $region3: #{tpu_custom_call.1} parent=1 // pred_check_branch
      %11 = sbr.rel (0) target = $region5
    $region4: #{tpu_custom_call.1} parent=1 // pred_region
      %13 = vsyncadd [#allocation3], 0
      %s15 = sshll.u32 %s0, 4
      %s16 = int_to_ptr.hbm [resolvable:$true] %s15
      %s17 = sshll.u32 [#allocation2], 4
      %s18 = int_to_ptr.vmem [resolvable:$true] %s17
      %20 = dma.hbm_to_vmem [thread:$0]  %s16, 512, %s18, [#allocation3]
    $region5: #{tpu_custom_call.1} parent=1 // pred_fallthru
      _
    // Predicated region
    $region6: #{tpu_custom_call.1} parent=1 // pred_check
      _
    $region7: #{tpu_custom_call.1} parent=1 // pred_check_branch
      %22 = sbr.rel (0) target = $region9
    $region8: #{tpu_custom_call.1} parent=1 // pred_region
      %24 = vsyncadd [#allocation6], 0
      %s26 = sshll.u32 %s1, 4
      %s27 = int_to_ptr.hbm [resolvable:$true] %s26
      %s28 = sshll.u32 [#allocation5], 4
      %s29 = int_to_ptr.vmem [resolvable:$true] %s28
      %31 = dma.hbm_to_vmem [thread:$0]  %s27, 512, %s29, [#allocation6]
    $region9: #{tpu_custom_call.1} parent=1 // pred_fallthru
      _
    // Predicated region
    $region10: #{tpu_custom_call.1} parent=1 // pred_check
      _
    $region11: #{tpu_custom_call.1} parent=1 // pred_check_branch
      %33 = sbr.rel (0) target = $region13
    $region12: #{tpu_custom_call.1} parent=1 // pred_region
      %35 = dma.done [#allocation3], 512
    $region13: #{tpu_custom_call.1} parent=1 // pred_fallthru
      _
    // Predicated region
    $region14: #{tpu_custom_call.1} parent=1 // pred_check
      _
    $region15: #{tpu_custom_call.1} parent=1 // pred_check_branch
      %37 = sbr.rel (0) target = $region17
    $region16: #{tpu_custom_call.1} parent=1 // pred_region
      %39 = dma.done [#allocation6], 512
    $region17: #{tpu_custom_call.1} parent=1 // pred_fallthru
      _
    %v40 = vld [vmem:[#allocation2] sm:$0xff]
    %v41 = vld [vmem:[#allocation2 + $0x8] sm:$0xff]
    %v42 = vld [vmem:[#allocation2 + $0x10] sm:$0xff]
    %v43 = vld [vmem:[#allocation2 + $0x18] sm:$0xff]
    %v44 = vld [vmem:[#allocation5] sm:$0xff]
    %v45 = vld [vmem:[#allocation5 + $0x8] sm:$0xff]
    %v46 = vld [vmem:[#allocation5 + $0x10] sm:$0xff]
    %v47 = vld [vmem:[#allocation5 + $0x18] sm:$0xff]
    %v48 = vmax.f32 %v40, 0.0
    %v49 = vmax.f32 %v41, 0.0
    %v50 = vmax.f32 %v42, 0.0
    %v51 = vmax.f32 %v43, 0.0
    %v52 = vmul.f32 %v40, %v44
    %v53 = vmul.f32 %v41, %v45
    %v54 = vmul.f32 %v42, %v46
    %v55 = vmul.f32 %v43, %v47
    %v56 = vsub.f32 %v48, %v52
    %v57 = vsub.f32 %v49, %v53
    %v58 = vsub.f32 %v50, %v54
    %v59 = vsub.f32 %v51, %v55
    %v60 = vand.u32 2147483647, %v40
    %v61 = vand.u32 2147483647, %v41
    %v62 = vand.u32 2147483647, %v42
    %v63 = vand.u32 2147483647, %v43
    %v64 = vsub.f32 0.0, %v60
    %v65 = vsub.f32 0.0, %v61
    %v66 = vsub.f32 0.0, %v62
    %v67 = vsub.f32 0.0, %v63
    %v68 = vmul.f32 %v64, 1.442695
    %v69 = vpow.pop %v68
    %v70 = vmul.f32 %v65, 1.442695
    %v71 = vpow.pop %v70
    %v72 = vmul.f32 %v66, 1.442695
    %v73 = vpow.pop %v72
    %v74 = vmul.f32 %v67, 1.442695
    %v75 = vpow.pop %v74
    %v76 = vadd.f32 %v69, 1.0
    %v77 = vlog2.pop %v76
    %v78 = vmul.f32 %v77, 0.6931472
    %v79 = vmul.f32 -0.5, %v69
    %v80 = vadd.f32 %v79, 1.0
    %v81 = vmul.f32 %v80, %v69
    %v82 = vand.u32 2147483647, %v69
    %vm83 = vcmp.lt.f32.partialorder %v82, 0.0004427343
    %v84 = vsel %vm83, %v81, %v78
    %v85 = vadd.f32 %v71, 1.0
    %v86 = vlog2.pop %v85
    %v87 = vmul.f32 %v86, 0.6931472
    %v88 = vmul.f32 -0.5, %v71
    %v89 = vadd.f32 %v88, 1.0
    %v90 = vmul.f32 %v89, %v71
    %v91 = vand.u32 2147483647, %v71
    %vm92 = vcmp.lt.f32.partialorder %v91, 0.0004427343
    %v93 = vsel %vm92, %v90, %v87
    %v94 = vadd.f32 %v73, 1.0
    %v95 = vlog2.pop %v94
    %v96 = vmul.f32 %v95, 0.6931472
    %v97 = vmul.f32 -0.5, %v73
    %v98 = vadd.f32 %v97, 1.0
    %v99 = vmul.f32 %v98, %v73
    %v100 = vand.u32 2147483647, %v73
    %vm101 = vcmp.lt.f32.partialorder %v100, 0.0004427343
    %v102 = vsel %vm101, %v99, %v96
    %v103 = vadd.f32 %v75, 1.0
    %v104 = vlog2.pop %v103
    %v105 = vmul.f32 %v104, 0.6931472
    %v106 = vmul.f32 -0.5, %v75
    %v107 = vadd.f32 %v106, 1.0
    %v108 = vmul.f32 %v107, %v75
    %v109 = vand.u32 2147483647, %v75
    %vm110 = vcmp.lt.f32.partialorder %v109, 0.0004427343
    %v111 = vsel %vm110, %v108, %v105
    %v112 = vadd.f32 %v56, %v84
    %v113 = vadd.f32 %v57, %v93
    %v114 = vadd.f32 %v58, %v102
    %v115 = vadd.f32 %v59, %v111
    %v116 = vmul.f32 %v112, 1.442695
    %v117 = vpow.pop %v116
    %v118 = vmul.f32 %v113, 1.442695
    %v119 = vpow.pop %v118
    %v120 = vmul.f32 %v114, 1.442695
    %v121 = vpow.pop %v120
    %v122 = vmul.f32 %v115, 1.442695
    %v123 = vpow.pop %v122
    %v124 = vsub.f32 1.0, %v117
    %v125 = vsub.f32 1.0, %v119
    %v126 = vsub.f32 1.0, %v121
    %v127 = vsub.f32 1.0, %v123
    %v128 = vmul.f32 %v124, %v124
    %v129 = vmul.f32 %v125, %v125
    %v130 = vmul.f32 %v126, %v126
    %v131 = vmul.f32 %v127, %v127
    %v132 = vmul.f32 %v128, 0.25
    %v133 = vmul.f32 %v129, 0.25
    %v134 = vmul.f32 %v130, 0.25
    %v135 = vmul.f32 %v131, 0.25
    %v136 = vmul.f32 %v132, %v112
    %v137 = vmul.f32 %v133, %v113
    %v138 = vmul.f32 %v134, %v114
    %v139 = vmul.f32 %v135, %v115
    %140 = vst [vmem:[#allocation7] sm:$0xff] %v136
    %141 = vst [vmem:[#allocation7 + $0x8] sm:$0xff] %v137
    %142 = vst [vmem:[#allocation7 + $0x10] sm:$0xff] %v138
    %143 = vst [vmem:[#allocation7 + $0x18] sm:$0xff] %v139
    // Predicated region
    $region18: #{tpu_custom_call.1} parent=1 // pred_check
      _
    $region19: #{tpu_custom_call.1} parent=1 // pred_check_branch
      %145 = sbr.rel (0) target = $region21
    $region20: #{tpu_custom_call.1} parent=1 // pred_region
      %147 = vsyncadd [#allocation4], 0
      %s149 = sshll.u32 [#allocation7], 4
      %s150 = int_to_ptr.vmem [resolvable:$true] %s149
      %s151 = sshll.u32 %s2, 4
      %s152 = int_to_ptr.hbm [resolvable:$true] %s151
      %154 = dma.vmem_to_hbm [thread:$0]  %s150, 512, %s152, [#allocation4]
    $region21: #{tpu_custom_call.1} parent=1 // pred_fallthru
      _
    // Predicated region
    $region22: #{tpu_custom_call.1} parent=1 // pred_check
      _
    $region23: #{tpu_custom_call.1} parent=1 // pred_check_branch
      %156 = sbr.rel (0) target = $region25
    $region24: #{tpu_custom_call.1} parent=1 // pred_region
      %158 = dma.done [#allocation4], 512
    $region25: #{tpu_custom_call.1} parent=1 // pred_fallthru
      _
    %159 = vsyncpa [#allocation3], 1
    %160 = vsyncpa [#allocation6], 1
    %161 = vsyncpa [#allocation4], 1

</llo_original>
